<compile_context>
chip_gen: v7x
topology: tpu7x:2x2x1
jax: 0.10.0
libtpu: 0.0.40
codegen_flags: <defaults>
</compile_context>

<pallas_src>
import functools

import jax
import jax.numpy as jnp
from jax.experimental import pallas as pl
from jax.experimental.pallas import tpu as pltpu


_SQRT2 = 1.4142135623730951


def _erf_approx(x):
    """Abramowitz & Stegun 7.1.26 erf approximation (|err| <= 1.5e-7)."""
    ax = jnp.abs(x)
    t = 1.0 / (1.0 + 0.3275911 * ax)
    poly = t * (0.254829592
                + t * (-0.284496736
                       + t * (1.421413741
                              + t * (-1.453152027
                                     + t * 1.061405429))))
    y = 1.0 - poly * jnp.exp(-ax * ax)
    return jnp.where(x >= 0.0, y, -y)


def _gelu_exact(x):
    return 0.5 * x * (1.0 + _erf_approx(x / _SQRT2))


def _layernorm(v, g, b, eps):
    """LN with gamma folded into the rsqrt scale; var via E[x^2] - mu^2."""
    mu = jnp.mean(v, axis=-1, keepdims=True)
    ms = jnp.mean(v * v, axis=-1, keepdims=True)
    var = ms - mu * mu
    scale = jax.lax.rsqrt(var + eps) * g
    return (v - mu) * scale + b


def _mcswin_block_kernel(x_ref, g1_ref, b1_ref, g2_ref, b2_ref,
                         w1_ref, bf1_ref, w2_ref, bf2_ref, o_ref,
                         *, eps, approx_gelu):
    """One (TM, C) token tile per grid step.

    x_ref  : (TM, C)   input tokens (f32 in the demo)
    g*/b*  : (1, C)    LayerNorm1/2 gamma & beta (f32)
    w1_ref : (C, H)    Mlp.fc1 weight (bf16, resident)   bf1_ref : (1, H) f32
    w2_ref : (H, C)    Mlp.fc2 weight (bf16, resident)   bf2_ref : (1, C) f32
    o_ref  : (TM, C)   output tokens
    """
    x = x_ref[...].astype(jnp.float32)                         # (TM, C)

    # ---- LayerNorm1 + residual:  h = x + LN1(x) ---------------------------
    h = x + _layernorm(x, g1_ref[...], b1_ref[...], eps)       # (TM, C)

    # ---- LayerNorm2 --------------------------------------------------------
    y2 = _layernorm(h, g2_ref[...], b2_ref[...], eps)          # (TM, C)

    # ---- Mlp: fc1 -> GELU -> fc2 (bf16 MXU operands, f32 accumulate) -------
    mm_dtype = w1_ref.dtype
    z = jnp.dot(y2.astype(mm_dtype), w1_ref[...],
                preferred_element_type=jnp.float32)            # (TM, H) f32
    z = z + bf1_ref[...]
    if approx_gelu:
        z = jax.nn.gelu(z, approximate=True)                   # tanh / EUP path
    else:
        z = _gelu_exact(z)                                     # nn.GELU() parity
    m = jnp.dot(z.astype(mm_dtype), w2_ref[...],
                preferred_element_type=jnp.float32)            # (TM, C) f32

    # ---- second residual + bias + store ------------------------------------
    o_ref[...] = (h + m + bf2_ref[...]).astype(o_ref.dtype)


def _pick_tm(m, block_rows):
    """Largest multiple-of-8 tile that divides m and is <= block_rows."""
    cap = max(8, min(block_rows, m))
    cap -= cap % 8
    for t in range(cap, 7, -8):
        if m % t == 0:
            return t
    return None


def mcswin_block_forward(x, ln1_w, ln1_b, ln2_w, ln2_b,
                         fc1_w, fc1_b, fc2_w, fc2_b,
                         attn_mask=None, *, eps=1e-5, block_rows=1024,
                         matmul_dtype=jnp.bfloat16, approx_gelu=False):
    """MCSwinTransformerBlock.forward (layer_scale=False, drop=0, drop_path=0).

    fc1_w/fc2_w are expected in (in, out) layout (transpose nn.Linear.weight
    when importing PyTorch parameters).
    """
    del attn_mask  # unused by the PyTorch forward as well
    B, N, C = x.shape
    H = fc1_w.shape[1]
    M = B * N
    xm = x.reshape(M, C)

    # Token tile: largest multiple of 8 dividing M (no padding / no tile
    # shrink for single-TC chips).  Ragged M falls back to a minimal pad.
    tm = _pick_tm(M, block_rows)
    if tm is None:
        Mp = -(-M // 8) * 8
        xm = jnp.pad(xm, ((0, Mp - M), (0, 0)))
        tm = _pick_tm(Mp, block_rows)
    else:
        Mp = M
    grid_m = Mp // tm

    f32 = jnp.float32
    args = (
        xm,
        ln1_w.reshape(1, C).astype(f32), ln1_b.reshape(1, C).astype(f32),
        ln2_w.reshape(1, C).astype(f32), ln2_b.reshape(1, C).astype(f32),
        fc1_w.astype(matmul_dtype), fc1_b.reshape(1, H).astype(f32),
        fc2_w.astype(matmul_dtype), fc2_b.reshape(1, C).astype(f32),
    )

    # VMEM budget: double-buffered blocks + headroom, kept below v7x's 64 MiB.
    x_bytes = xm.dtype.itemsize
    w_bytes = jnp.dtype(matmul_dtype).itemsize
    block_bytes = (
        2 * tm * C * x_bytes                 # x (double-buffered)
        + 2 * tm * C * x.dtype.itemsize      # out
        + 2 * 4 * C * 4                      # gammas / betas
        + 2 * (C * H + H * C) * w_bytes      # resident weights
        + 2 * (H + C) * 4                    # biases
    )
    vmem_limit = int(min(max(4 * block_bytes, 32 * 2 ** 20), 48 * 2 ** 20))

    kernel = functools.partial(_mcswin_block_kernel, eps=eps,
                               approx_gelu=approx_gelu)
    out = pl.pallas_call(
        kernel,
        out_shape=jax.ShapeDtypeStruct((Mp, C), x.dtype),
        grid=(grid_m,),
        in_specs=[
            pl.BlockSpec((tm, C), lambda i: (i, 0)),   # x tokens
            pl.BlockSpec((1, C), lambda i: (0, 0)),    # LN1 gamma (resident)
            pl.BlockSpec((1, C), lambda i: (0, 0)),    # LN1 beta
            pl.BlockSpec((1, C), lambda i: (0, 0)),    # LN2 gamma
            pl.BlockSpec((1, C), lambda i: (0, 0)),    # LN2 beta
            pl.BlockSpec((C, H), lambda i: (0, 0)),    # fc1 weight (bf16, resident)
            pl.BlockSpec((1, H), lambda i: (0, 0)),    # fc1 bias
            pl.BlockSpec((H, C), lambda i: (0, 0)),    # fc2 weight (bf16, resident)
            pl.BlockSpec((1, C), lambda i: (0, 0)),    # fc2 bias
        ],
        out_specs=pl.BlockSpec((tm, C), lambda i: (i, 0)),
        compiler_params=pltpu.CompilerParams(
            dimension_semantics=("parallel",),
            vmem_limit_bytes=vmem_limit,
        ),
    )(*args)

    if Mp != M:
        out = out[:M]
    return out.reshape(B, N, C)


# ---------------- pure-JAX reference (for correctness check) ----------------
def mcswin_block_reference(x, ln1_w, ln1_b, ln2_w, ln2_b,
                           fc1_w, fc1_b, fc2_w, fc2_b,
                           *, eps=1e-5, matmul_dtype=None):
    """matmul_dtype=None -> exact f32 module semantics;
       matmul_dtype=bf16 -> emulates the kernel's bf16 MXU operands."""
    def ln(v, g, b):
        mu = jnp.mean(v, axis=-1, keepdims=True)
        var = jnp.mean((v - mu) ** 2, axis=-1, keepdims=True)
        return (v - mu) * jax.lax.rsqrt(var + eps) * g + b

    def mm(a, w):
        if matmul_dtype is not None:
            a = a.astype(matmul_dtype)
            w = w.astype(matmul_dtype)
        return jnp.dot(a, w, preferred_element_type=jnp.float32)

    h = x + ln(x, ln1_w, ln1_b)
    y2 = ln(h, ln2_w, ln2_b)
    z = jax.nn.gelu(mm(y2, fc1_w) + fc1_b, approximate=False)  # exact, as nn.GELU()
    return h + mm(z, fc2_w) + fc2_b


if __name__ == "__main__":
    # Small, lane-dense shapes consistent with the module: (B, N, C), hidden=4*C.
    B, N, C = 2, 8, 128
    MLP_RATIO = 4
    H = C * MLP_RATIO  # 512

    key = jax.random.PRNGKey(0)
    kx, k1, k2, k3, k4 = jax.random.split(key, 5)
    x = jax.random.normal(kx, (B, N, C), dtype=jnp.float32)
    attn_mask = None  # unused by MCSwinTransformerBlock.forward

    # LayerNorm default init: weight=1, bias=0.
    ln1_w = jnp.ones((C,), jnp.float32)
    ln1_b = jnp.zeros((C,), jnp.float32)
    ln2_w = jnp.ones((C,), jnp.float32)
    ln2_b = jnp.zeros((C,), jnp.float32)
    # Mlp weights stored as (in, out) so the kernel does y @ W + b.
    fc1_w = 0.05 * jax.random.normal(k1, (C, H), dtype=jnp.float32)
    fc1_b = 0.05 * jax.random.normal(k2, (H,), dtype=jnp.float32)
    fc2_w = 0.05 * jax.random.normal(k3, (H, C), dtype=jnp.float32)
    fc2_b = 0.05 * jax.random.normal(k4, (C,), dtype=jnp.float32)

    out = mcswin_block_forward(x, ln1_w, ln1_b, ln2_w, ln2_b,
                               fc1_w, fc1_b, fc2_w, fc2_b, attn_mask)
    out = jax.block_until_ready(out)
    assert out.shape == (B, N, C)

    # Tight check: reference that emulates the kernel's bf16 MXU operands.
    ref_bf16 = mcswin_block_reference(x, ln1_w, ln1_b, ln2_w, ln2_b,
                                      fc1_w, fc1_b, fc2_w, fc2_b,
                                      matmul_dtype=jnp.bfloat16)
    assert jnp.allclose(out, ref_bf16, atol=1e-3, rtol=1e-3), \
        "mismatch vs bf16-emulating reference"

    # Loose check: exact f32 module semantics (bf16 MXU rounding only).
    ref_f32 = mcswin_block_reference(x, ln1_w, ln1_b, ln2_w, ln2_b,
                                     fc1_w, fc1_b, fc2_w, fc2_b)
    assert jnp.allclose(out, ref_f32, atol=2e-2, rtol=2e-2), \
        "mismatch vs f32 reference"

    print("KERNEL_OK")
</pallas_src>

<mosaic_0001>
module attributes {stable_mosaic.version = 11 : i64} {
  func.func @_mcswin_block_kernel(%arg0: i32, %arg1: memref<16x128xf32, #tpu.memory_space<vmem>>, %arg2: memref<1x128xf32, #tpu.memory_space<vmem>>, %arg3: memref<1x128xf32, #tpu.memory_space<vmem>>, %arg4: memref<1x128xf32, #tpu.memory_space<vmem>>, %arg5: memref<1x128xf32, #tpu.memory_space<vmem>>, %arg6: memref<128x512xbf16, #tpu.memory_space<vmem>>, %arg7: memref<1x512xf32, #tpu.memory_space<vmem>>, %arg8: memref<512x128xbf16, #tpu.memory_space<vmem>>, %arg9: memref<1x128xf32, #tpu.memory_space<vmem>>, %arg10: memref<16x128xf32, #tpu.memory_space<vmem>>) attributes {dimension_semantics = [#tpu.dimension_semantics<parallel>], iteration_bounds = array<i64: 1>, scalar_prefetch = 0 : i64, scratch_operands = 0 : i64, tpu.core_type = #tpu.core_type<tc>, window_params = [{transform_indices = @transform_0, window_bounds = array<i64: 16, 128>}, {pipeline_mode = #tpu.pipeline_mode<synchronous>, transform_indices = @transform_1, window_bounds = array<i64: 1, 128>}, {pipeline_mode = #tpu.pipeline_mode<synchronous>, transform_indices = @transform_2, window_bounds = array<i64: 1, 128>}, {pipeline_mode = #tpu.pipeline_mode<synchronous>, transform_indices = @transform_3, window_bounds = array<i64: 1, 128>}, {pipeline_mode = #tpu.pipeline_mode<synchronous>, transform_indices = @transform_4, window_bounds = array<i64: 1, 128>}, {pipeline_mode = #tpu.pipeline_mode<synchronous>, transform_indices = @transform_5, window_bounds = array<i64: 128, 512>}, {pipeline_mode = #tpu.pipeline_mode<synchronous>, transform_indices = @transform_6, window_bounds = array<i64: 1, 512>}, {pipeline_mode = #tpu.pipeline_mode<synchronous>, transform_indices = @transform_7, window_bounds = array<i64: 512, 128>}, {pipeline_mode = #tpu.pipeline_mode<synchronous>, transform_indices = @transform_8, window_bounds = array<i64: 1, 128>}, {transform_indices = @transform_9, window_bounds = array<i64: 16, 128>}]} {
    %c0 = arith.constant 0 : index
    %c0_0 = arith.constant 0 : index
    %0 = vector.load %arg1[%c0, %c0_0] : memref<16x128xf32, #tpu.memory_space<vmem>>, vector<16x128xf32>
    %c0_1 = arith.constant 0 : index
    %c0_2 = arith.constant 0 : index
    %1 = vector.load %arg2[%c0_1, %c0_2] : memref<1x128xf32, #tpu.memory_space<vmem>>, vector<1x128xf32>
    %c0_3 = arith.constant 0 : index
    %c0_4 = arith.constant 0 : index
    %2 = vector.load %arg3[%c0_3, %c0_4] : memref<1x128xf32, #tpu.memory_space<vmem>>, vector<1x128xf32>
    %cst = arith.constant dense<0.000000e+00> : vector<16xf32>
    %3 = vector.multi_reduction <add>, %0, %cst [1] : vector<16x128xf32> to vector<16xf32>
    %4 = vector.shape_cast %3 : vector<16xf32> to vector<16x1xf32>
    %cst_5 = arith.constant 1.280000e+02 : f32
    %5 = vector.broadcast %cst_5 : f32 to vector<16x1xf32>
    %6 = arith.divf %4, %5 : vector<16x1xf32>
    %7 = arith.mulf %0, %0 : vector<16x128xf32>
    %cst_6 = arith.constant dense<0.000000e+00> : vector<16xf32>
    %8 = vector.multi_reduction <add>, %7, %cst_6 [1] : vector<16x128xf32> to vector<16xf32>
    %9 = vector.shape_cast %8 : vector<16xf32> to vector<16x1xf32>
    %cst_7 = arith.constant 1.280000e+02 : f32
    %10 = vector.broadcast %cst_7 : f32 to vector<16x1xf32>
    %11 = arith.divf %9, %10 : vector<16x1xf32>
    %12 = arith.mulf %6, %6 : vector<16x1xf32>
    %13 = arith.subf %11, %12 : vector<16x1xf32>
    %cst_8 = arith.constant 9.99999974E-6 : f32
    %14 = vector.broadcast %cst_8 : f32 to vector<16x1xf32>
    %15 = arith.addf %13, %14 : vector<16x1xf32>
    %16 = math.rsqrt %15 : vector<16x1xf32>
    %17 = vector.broadcast %16 : vector<16x1xf32> to vector<16x128xf32>
    %18 = vector.broadcast %1 : vector<1x128xf32> to vector<16x128xf32>
    %19 = arith.mulf %17, %18 : vector<16x128xf32>
    %20 = vector.broadcast %6 : vector<16x1xf32> to vector<16x128xf32>
    %21 = arith.subf %0, %20 : vector<16x128xf32>
    %22 = arith.mulf %21, %19 : vector<16x128xf32>
    %23 = vector.broadcast %2 : vector<1x128xf32> to vector<16x128xf32>
    %24 = arith.addf %22, %23 : vector<16x128xf32>
    %25 = arith.addf %0, %24 : vector<16x128xf32>
    %c0_9 = arith.constant 0 : index
    %c0_10 = arith.constant 0 : index
    %26 = vector.load %arg4[%c0_9, %c0_10] : memref<1x128xf32, #tpu.memory_space<vmem>>, vector<1x128xf32>
    %c0_11 = arith.constant 0 : index
    %c0_12 = arith.constant 0 : index
    %27 = vector.load %arg5[%c0_11, %c0_12] : memref<1x128xf32, #tpu.memory_space<vmem>>, vector<1x128xf32>
    %cst_13 = arith.constant dense<0.000000e+00> : vector<16xf32>
    %28 = vector.multi_reduction <add>, %25, %cst_13 [1] : vector<16x128xf32> to vector<16xf32>
    %29 = vector.shape_cast %28 : vector<16xf32> to vector<16x1xf32>
    %cst_14 = arith.constant 1.280000e+02 : f32
    %30 = vector.broadcast %cst_14 : f32 to vector<16x1xf32>
    %31 = arith.divf %29, %30 : vector<16x1xf32>
    %32 = arith.mulf %25, %25 : vector<16x128xf32>
    %cst_15 = arith.constant dense<0.000000e+00> : vector<16xf32>
    %33 = vector.multi_reduction <add>, %32, %cst_15 [1] : vector<16x128xf32> to vector<16xf32>
    %34 = vector.shape_cast %33 : vector<16xf32> to vector<16x1xf32>
    %cst_16 = arith.constant 1.280000e+02 : f32
    %35 = vector.broadcast %cst_16 : f32 to vector<16x1xf32>
    %36 = arith.divf %34, %35 : vector<16x1xf32>
    %37 = arith.mulf %31, %31 : vector<16x1xf32>
    %38 = arith.subf %36, %37 : vector<16x1xf32>
    %cst_17 = arith.constant 9.99999974E-6 : f32
    %39 = vector.broadcast %cst_17 : f32 to vector<16x1xf32>
    %40 = arith.addf %38, %39 : vector<16x1xf32>
    %41 = math.rsqrt %40 : vector<16x1xf32>
    %42 = vector.broadcast %41 : vector<16x1xf32> to vector<16x128xf32>
    %43 = vector.broadcast %26 : vector<1x128xf32> to vector<16x128xf32>
    %44 = arith.mulf %42, %43 : vector<16x128xf32>
    %45 = vector.broadcast %31 : vector<16x1xf32> to vector<16x128xf32>
    %46 = arith.subf %25, %45 : vector<16x128xf32>
    %47 = arith.mulf %46, %44 : vector<16x128xf32>
    %48 = vector.broadcast %27 : vector<1x128xf32> to vector<16x128xf32>
    %49 = arith.addf %47, %48 : vector<16x128xf32>
    %50 = arith.truncf %49 : vector<16x128xf32> to vector<16x128xbf16>
    %c0_18 = arith.constant 0 : index
    %c0_19 = arith.constant 0 : index
    %51 = vector.load %arg6[%c0_18, %c0_19] : memref<128x512xbf16, #tpu.memory_space<vmem>>, vector<128x512xbf16>
    %cst_20 = arith.constant dense<0.000000e+00> : vector<16x512xf32>
    %52 = tpu.matmul %50, %51, %cst_20 {dimension_numbers = #tpu.dot_dimension_numbers<[1], [0], [0], [1], [0, 0, 1, 1], [], []>} : vector<16x128xbf16>, vector<128x512xbf16>, vector<16x512xf32> -> vector<16x512xf32>
    %c0_21 = arith.constant 0 : index
    %c0_22 = arith.constant 0 : index
    %53 = vector.load %arg7[%c0_21, %c0_22] : memref<1x512xf32, #tpu.memory_space<vmem>>, vector<1x512xf32>
    %54 = vector.broadcast %53 : vector<1x512xf32> to vector<16x512xf32>
    %55 = arith.addf %52, %54 : vector<16x512xf32>
    %cst_23 = arith.constant 5.000000e-01 : f32
    %56 = vector.broadcast %cst_23 : f32 to vector<16x512xf32>
    %57 = arith.mulf %56, %55 : vector<16x512xf32>
    %cst_24 = arith.constant 1.41421354 : f32
    %58 = vector.broadcast %cst_24 : f32 to vector<16x512xf32>
    %59 = arith.divf %55, %58 : vector<16x512xf32>
    %60 = math.absf %59 : vector<16x512xf32>
    %cst_25 = arith.constant 0.327591091 : f32
    %61 = vector.broadcast %cst_25 : f32 to vector<16x512xf32>
    %62 = arith.mulf %61, %60 : vector<16x512xf32>
    %cst_26 = arith.constant 1.000000e+00 : f32
    %63 = vector.broadcast %cst_26 : f32 to vector<16x512xf32>
    %64 = arith.addf %63, %62 : vector<16x512xf32>
    %cst_27 = arith.constant 1.000000e+00 : f32
    %65 = vector.broadcast %cst_27 : f32 to vector<16x512xf32>
    %66 = arith.divf %65, %64 : vector<16x512xf32>
    %cst_28 = arith.constant 1.06140542 : f32
    %67 = vector.broadcast %cst_28 : f32 to vector<16x512xf32>
    %68 = arith.mulf %66, %67 : vector<16x512xf32>
    %cst_29 = arith.constant -1.45315206 : f32
    %69 = vector.broadcast %cst_29 : f32 to vector<16x512xf32>
    %70 = arith.addf %69, %68 : vector<16x512xf32>
    %71 = arith.mulf %66, %70 : vector<16x512xf32>
    %cst_30 = arith.constant 1.42141378 : f32
    %72 = vector.broadcast %cst_30 : f32 to vector<16x512xf32>
    %73 = arith.addf %72, %71 : vector<16x512xf32>
    %74 = arith.mulf %66, %73 : vector<16x512xf32>
    %cst_31 = arith.constant -0.284496725 : f32
    %75 = vector.broadcast %cst_31 : f32 to vector<16x512xf32>
    %76 = arith.addf %75, %74 : vector<16x512xf32>
    %77 = arith.mulf %66, %76 : vector<16x512xf32>
    %cst_32 = arith.constant 0.254829586 : f32
    %78 = vector.broadcast %cst_32 : f32 to vector<16x512xf32>
    %79 = arith.addf %78, %77 : vector<16x512xf32>
    %80 = arith.mulf %66, %79 : vector<16x512xf32>
    %cst_33 = arith.constant 0.000000e+00 : f32
    %81 = vector.broadcast %cst_33 : f32 to vector<16x512xf32>
    %82 = arith.subf %81, %60 : vector<16x512xf32>
    %83 = arith.mulf %82, %60 : vector<16x512xf32>
    %84 = math.exp %83 : vector<16x512xf32>
    %85 = arith.mulf %80, %84 : vector<16x512xf32>
    %cst_34 = arith.constant 1.000000e+00 : f32
    %86 = vector.broadcast %cst_34 : f32 to vector<16x512xf32>
    %87 = arith.subf %86, %85 : vector<16x512xf32>
    %cst_35 = arith.constant 0.000000e+00 : f32
    %88 = vector.broadcast %cst_35 : f32 to vector<16x512xf32>
    %89 = arith.cmpf oge, %59, %88 : vector<16x512xf32>
    %cst_36 = arith.constant 0.000000e+00 : f32
    %90 = vector.broadcast %cst_36 : f32 to vector<16x512xf32>
    %91 = arith.subf %90, %87 : vector<16x512xf32>
    %92 = arith.select %89, %87, %91 : vector<16x512xi1>, vector<16x512xf32>
    %cst_37 = arith.constant 1.000000e+00 : f32
    %93 = vector.broadcast %cst_37 : f32 to vector<16x512xf32>
    %94 = arith.addf %93, %92 : vector<16x512xf32>
    %95 = arith.mulf %57, %94 : vector<16x512xf32>
    %96 = arith.truncf %95 : vector<16x512xf32> to vector<16x512xbf16>
    %c0_38 = arith.constant 0 : index
    %c0_39 = arith.constant 0 : index
    %97 = vector.load %arg8[%c0_38, %c0_39] : memref<512x128xbf16, #tpu.memory_space<vmem>>, vector<512x128xbf16>
    %cst_40 = arith.constant dense<0.000000e+00> : vector<16x128xf32>
    %98 = tpu.matmul %96, %97, %cst_40 {dimension_numbers = #tpu.dot_dimension_numbers<[1], [0], [0], [1], [0, 0, 1, 1], [], []>} : vector<16x512xbf16>, vector<512x128xbf16>, vector<16x128xf32> -> vector<16x128xf32>
    %99 = arith.addf %25, %98 : vector<16x128xf32>
    %c0_41 = arith.constant 0 : index
    %c0_42 = arith.constant 0 : index
    %100 = vector.load %arg9[%c0_41, %c0_42] : memref<1x128xf32, #tpu.memory_space<vmem>>, vector<1x128xf32>
    %101 = vector.broadcast %100 : vector<1x128xf32> to vector<16x128xf32>
    %102 = arith.addf %99, %101 : vector<16x128xf32>
    %c0_43 = arith.constant 0 : index
    %c0_44 = arith.constant 0 : index
    %103 = vector.load %arg10[%c0_43, %c0_44] : memref<16x128xf32, #tpu.memory_space<vmem>>, vector<16x128xf32>
    tpu.vector_store %arg10[%c0_43, %c0_44], %102 {strides = array<i32>} : memref<16x128xf32, #tpu.memory_space<vmem>>, vector<16x128xf32>,
    return
  }
  func.func @transform_0(%arg0: i32) -> (i32, i32) {
    %c0_i32 = arith.constant 0 : i32
    %c0_i32_0 = arith.constant 0 : i32
    return %arg0, %c0_i32 : i32, i32
  }
  func.func @transform_1(%arg0: i32) -> (i32, i32) {
    %c0_i32 = arith.constant 0 : i32
    %c0_i32_0 = arith.constant 0 : i32
    %c0_i32_1 = arith.constant 0 : i32
    return %c0_i32, %c0_i32_0 : i32, i32
  }
  func.func @transform_2(%arg0: i32) -> (i32, i32) {
    %c0_i32 = arith.constant 0 : i32
    %c0_i32_0 = arith.constant 0 : i32
    %c0_i32_1 = arith.constant 0 : i32
    return %c0_i32, %c0_i32_0 : i32, i32
  }
  func.func @transform_3(%arg0: i32) -> (i32, i32) {
    %c0_i32 = arith.constant 0 : i32
    %c0_i32_0 = arith.constant 0 : i32
    %c0_i32_1 = arith.constant 0 : i32
    return %c0_i32, %c0_i32_0 : i32, i32
  }
  func.func @transform_4(%arg0: i32) -> (i32, i32) {
    %c0_i32 = arith.constant 0 : i32
    %c0_i32_0 = arith.constant 0 : i32
    %c0_i32_1 = arith.constant 0 : i32
    return %c0_i32, %c0_i32_0 : i32, i32
  }
  func.func @transform_5(%arg0: i32) -> (i32, i32) {
    %c0_i32 = arith.constant 0 : i32
    %c0_i32_0 = arith.constant 0 : i32
    %c0_i32_1 = arith.constant 0 : i32
    return %c0_i32, %c0_i32_0 : i32, i32
  }
  func.func @transform_6(%arg0: i32) -> (i32, i32) {
    %c0_i32 = arith.constant 0 : i32
    %c0_i32_0 = arith.constant 0 : i32
    %c0_i32_1 = arith.constant 0 : i32
    return %c0_i32, %c0_i32_0 : i32, i32
  }
  func.func @transform_7(%arg0: i32) -> (i32, i32) {
    %c0_i32 = arith.constant 0 : i32
    %c0_i32_0 = arith.constant 0 : i32
    %c0_i32_1 = arith.constant 0 : i32
    return %c0_i32, %c0_i32_0 : i32, i32
  }
  func.func @transform_8(%arg0: i32) -> (i32, i32) {
    %c0_i32 = arith.constant 0 : i32
    %c0_i32_0 = arith.constant 0 : i32
    %c0_i32_1 = arith.constant 0 : i32
    return %c0_i32, %c0_i32_0 : i32, i32
  }
  func.func @transform_9(%arg0: i32) -> (i32, i32) {
    %c0_i32 = arith.constant 0 : i32
    %c0_i32_0 = arith.constant 0 : i32
    return %arg0, %c0_i32 : i32, i32
  }
}

</mosaic_0001>

<llo_original>
// kernel: tpu_custom_call.1
$region0: #{tpu_custom_call.1}
  #allocation0 [shape = 'u32[]', space=smem, size = 0x4, offset = 0x4, fixed_abs, tag = 'smem constant byte address 0x4 - core index']
  #allocation1 [shape = 'u32[144,128]{1,0:T(1,128)}', space=vmem, size = 0x12000, scoped, tag = 'internal scratch']
  %s0 = inlined_call_operand.hbm [shape: f32[16,128], index: 0, kind: input, shape index: {}]
  %s1 = inlined_call_operand.vmem [shape: f32[1,128], index: 1, kind: input, shape index: {}]
  %s2 = inlined_call_operand.vmem [shape: f32[1,128], index: 2, kind: input, shape index: {}]
  %s3 = inlined_call_operand.vmem [shape: f32[1,128], index: 3, kind: input, shape index: {}]
  %s4 = inlined_call_operand.vmem [shape: f32[1,128], index: 4, kind: input, shape index: {}]
  %s5 = inlined_call_operand.hbm [shape: bf16[128,512], index: 5, kind: input, shape index: {}]
  %s6 = inlined_call_operand.vmem [shape: f32[1,512], index: 6, kind: input, shape index: {}]
  %s7 = inlined_call_operand.hbm [shape: bf16[512,128], index: 7, kind: input, shape index: {}]
  %s8 = inlined_call_operand.vmem [shape: f32[1,128], index: 8, kind: input, shape index: {}]
  %s9 = inlined_call_operand.hbm [shape: f32[16,128], index: 9, kind: output, shape index: {}]
  %s10 = sld [smem:[#allocation0]]
  $region58: #{tpu_custom_call.1} parent=0
    _
  %s12 = ssub.s32 1, %s10
  %s13 = scalar_select 0, %s12, %s10
  $region1: #{tpu_custom_call.1} parent=0
    #allocation2 [shape = 'u8[8192]{0}', space=vmem, size = 0x2000, scoped, tag = 'input window, operand 0, single buffered']
    #allocation3 [shape = 's32[1]{0}', space=sflag, size = 0x4, scoped, tag = 'scoped memory for tpu_custom_call.1']
    #allocation4 [shape = 's32[1]{0}', space=sflag, size = 0x4, scoped, tag = 'scoped memory for tpu_custom_call.1']
    #allocation5 [shape = 'u8[131072]{0}', space=vmem, size = 0x20000, scoped, tag = 'input window, operand 5, single buffered']
    #allocation6 [shape = 's32[1]{0}', space=sflag, size = 0x4, scoped, tag = 'scoped memory for tpu_custom_call.1']
    #allocation7 [shape = 'u8[131072]{0}', space=vmem, size = 0x20000, scoped, tag = 'input window, operand 7, single buffered']
    #allocation8 [shape = 'u8[8192]{0}', space=vmem, size = 0x2000, scoped, tag = 'output window, operand 0, single buffered']
    %14 = vsyncpa [#allocation3], 0
    %15 = vsyncpa [#allocation6], 0
    %16 = vsyncpa [#allocation4], 0
    // Predicated region
    $region2: #{tpu_custom_call.1} parent=1 // pred_check
      _
    $region3: #{tpu_custom_call.1} parent=1 // pred_check_branch
      %18 = sbr.rel (0) target = $region5
    $region4: #{tpu_custom_call.1} parent=1 // pred_region
      %s20 = ssub.s32 256, 256
      %21 = vsyncadd [#allocation3], %s20
      %s22 = sshll.u32 [#allocation2], 4
      %s23 = int_to_ptr.vmem [resolvable:$true] %s22
      %28 = dma.hbm_to_vmem [thread:$0]  %s0, 256, %s23, [#allocation3], 128, 128, 8
    $region5: #{tpu_custom_call.1} parent=1 // pred_fallthru
      _
    // Predicated region
    $region6: #{tpu_custom_call.1} parent=1 // pred_check
      _
    $region7: #{tpu_custom_call.1} parent=1 // pred_check_branch
      %30 = sbr.rel (0) target = $region9
    $region8: #{tpu_custom_call.1} parent=1 // pred_region
      _
    $region9: #{tpu_custom_call.1} parent=1 // pred_fallthru
      _
    // Predicated region
    $region10: #{tpu_custom_call.1} parent=1 // pred_check
      _
    $region11: #{tpu_custom_call.1} parent=1 // pred_check_branch
      %32 = sbr.rel (0) target = $region13
    $region12: #{tpu_custom_call.1} parent=1 // pred_region
      _
    $region13: #{tpu_custom_call.1} parent=1 // pred_fallthru
      _
    // Predicated region
    $region14: #{tpu_custom_call.1} parent=1 // pred_check
      _
    $region15: #{tpu_custom_call.1} parent=1 // pred_check_branch
      %34 = sbr.rel (0) target = $region17
    $region16: #{tpu_custom_call.1} parent=1 // pred_region
      _
    $region17: #{tpu_custom_call.1} parent=1 // pred_fallthru
      _
    // Predicated region
    $region18: #{tpu_custom_call.1} parent=1 // pred_check
      _
    $region19: #{tpu_custom_call.1} parent=1 // pred_check_branch
      %36 = sbr.rel (0) target = $region21
    $region20: #{tpu_custom_call.1} parent=1 // pred_region
      _
    $region21: #{tpu_custom_call.1} parent=1 // pred_fallthru
      _
    // Predicated region
    $region22: #{tpu_custom_call.1} parent=1 // pred_check
      _
    $region23: #{tpu_custom_call.1} parent=1 // pred_check_branch
      %38 = sbr.rel (0) target = $region25
    $region24: #{tpu_custom_call.1} parent=1 // pred_region
      %s40 = ssub.s32 4096, 4096
      %41 = vsyncadd [#allocation6], %s40
      %s42 = sshll.u32 [#allocation5], 4
      %s43 = int_to_ptr.vmem [resolvable:$true] %s42
      %48 = dma.hbm_to_vmem [thread:$0]  %s5, 4096, %s43, [#allocation6], 256, 256, 16
    $region25: #{tpu_custom_call.1} parent=1 // pred_fallthru
      _
    // Predicated region
    $region26: #{tpu_custom_call.1} parent=1 // pred_check
      _
    $region27: #{tpu_custom_call.1} parent=1 // pred_check_branch
      %50 = sbr.rel (0) target = $region29
    $region28: #{tpu_custom_call.1} parent=1 // pred_region
      _
    $region29: #{tpu_custom_call.1} parent=1 // pred_fallthru
      _
    // Predicated region
    $region30: #{tpu_custom_call.1} parent=1 // pred_check
      _
    $region31: #{tpu_custom_call.1} parent=1 // pred_check_branch
      %52 = sbr.rel (0) target = $region33
    $region32: #{tpu_custom_call.1} parent=1 // pred_region
      %s54 = ssub.s32 4096, 4096
      %55 = vsyncadd [#allocation6], %s54
      %s56 = sshll.u32 [#allocation7], 4
      %s57 = int_to_ptr.vmem [resolvable:$true] %s56
      %62 = dma.hbm_to_vmem [thread:$0]  %s7, 4096, %s57, [#allocation6], 64, 64, 4
    $region33: #{tpu_custom_call.1} parent=1 // pred_fallthru
      _
    // Predicated region
    $region34: #{tpu_custom_call.1} parent=1 // pred_check
      _
    $region35: #{tpu_custom_call.1} parent=1 // pred_check_branch
      %64 = sbr.rel (0) target = $region37
    $region36: #{tpu_custom_call.1} parent=1 // pred_region
      _
    $region37: #{tpu_custom_call.1} parent=1 // pred_fallthru
      _
    // Predicated region
    $region38: #{tpu_custom_call.1} parent=1 // pred_check
      _
    $region39: #{tpu_custom_call.1} parent=1 // pred_check_branch
      %66 = sbr.rel (0) target = $region41
    $region40: #{tpu_custom_call.1} parent=1 // pred_region
      %67 = dma.done [#allocation3], 256
    $region41: #{tpu_custom_call.1} parent=1 // pred_fallthru
      _
    // Predicated region
    $region42: #{tpu_custom_call.1} parent=1 // pred_check
      _
    $region43: #{tpu_custom_call.1} parent=1 // pred_check_branch
      %69 = sbr.rel (0) target = $region45
    $region44: #{tpu_custom_call.1} parent=1 // pred_region
      %70 = dma.done [#allocation6], 4096
    $region45: #{tpu_custom_call.1} parent=1 // pred_fallthru
      _
    // Predicated region
    $region46: #{tpu_custom_call.1} parent=1 // pred_check
      _
    $region47: #{tpu_custom_call.1} parent=1 // pred_check_branch
      %72 = sbr.rel (0) target = $region49
    $region48: #{tpu_custom_call.1} parent=1 // pred_region
      %73 = dma.done [#allocation6], 4096
    $region49: #{tpu_custom_call.1} parent=1 // pred_fallthru
      _
    %v75 = vld [vmem:[#allocation2] sm:$0xff]
    %v76 = vld [vmem:[#allocation2 + $0x8] sm:$0xff]
    %v77 = vld [vmem:[%s1] sm:$0x1]
    %v78 = vld [vmem:[%s2] sm:$0x1]
    %79 = vadd.xlane.f32.xlu0 %v75
    %v80 = vpop.xlane.xlu0 %79
    %81 = vadd.xlane.f32.xlu0 %v76
    %v82 = vpop.xlane.xlu0 %81
    %v83 = vrcp.pop 128.0
    %v84 = vmul.f32 %v80, %v83
    %v85 = vmul.f32 %v82, %v83
    %v86 = vmul.f32 %v75, %v75
    %v87 = vmul.f32 %v76, %v76
    %88 = vadd.xlane.f32.xlu0 %v86
    %v89 = vpop.xlane.xlu0 %88
    %90 = vadd.xlane.f32.xlu0 %v87
    %v91 = vpop.xlane.xlu0 %90
    %v92 = vmul.f32 %v89, %v83
    %v93 = vmul.f32 %v91, %v83
    %v94 = vmul.f32 %v84, %v84
    %v95 = vmul.f32 %v85, %v85
    %v96 = vsub.f32 %v92, %v94
    %v97 = vsub.f32 %v93, %v95
    %v98 = vadd.f32 %v96, 1e-05
    %v99 = vadd.f32 %v97, 1e-05
    %v100 = vrsqrt.pop %v98
    %v101 = vrsqrt.pop %v99
    %v103 = vlaneseq
    %v104 = vshrl.u32 %v103, 7
    %v105 = vsub.s32 0, %v104
    %v106 = vrot.slane %v77, %v105
    %v108 = vmul.f32 %v100, %v106
    %v109 = vmul.f32 %v101, %v106
    %v110 = vsub.f32 %v75, %v84
    %v111 = vsub.f32 %v76, %v85
    %v112 = vmul.f32 %v110, %v108
    %v113 = vmul.f32 %v111, %v109
    %v115 = vlaneseq
    %v116 = vshrl.u32 %v115, 7
    %v117 = vsub.s32 0, %v116
    %v118 = vrot.slane %v78, %v117
    %v120 = vadd.f32 %v112, %v118
    %v121 = vadd.f32 %v113, %v118
    %v122 = vadd.f32 %v75, %v120
    %v123 = vadd.f32 %v76, %v121
    %v124 = vld [vmem:[%s3] sm:$0x1]
    %v125 = vld [vmem:[%s4] sm:$0x1]
    %126 = vadd.xlane.f32.xlu0 %v122
    %v127 = vpop.xlane.xlu0 %126
    %128 = vadd.xlane.f32.xlu0 %v123
    %v129 = vpop.xlane.xlu0 %128
    %v130 = vmul.f32 %v127, %v83
    %v131 = vmul.f32 %v129, %v83
    %v132 = vmul.f32 %v122, %v122
    %v133 = vmul.f32 %v123, %v123
    %134 = vadd.xlane.f32.xlu0 %v132
    %v135 = vpop.xlane.xlu0 %134
    %136 = vadd.xlane.f32.xlu0 %v133
    %v137 = vpop.xlane.xlu0 %136
    %v138 = vmul.f32 %v135, %v83
    %v139 = vmul.f32 %v137, %v83
    %v140 = vmul.f32 %v130, %v130
    %v141 = vmul.f32 %v131, %v131
    %v142 = vsub.f32 %v138, %v140
    %v143 = vsub.f32 %v139, %v141
    %v144 = vadd.f32 %v142, 1e-05
    %v145 = vadd.f32 %v143, 1e-05
    %v146 = vrsqrt.pop %v144
    %v147 = vrsqrt.pop %v145
    %v149 = vlaneseq
    %v150 = vshrl.u32 %v149, 7
    %v151 = vsub.s32 0, %v150
    %v152 = vrot.slane %v124, %v151
    %v154 = vmul.f32 %v146, %v152
    %v155 = vmul.f32 %v147, %v152
    %v156 = vsub.f32 %v122, %v130
    %v157 = vsub.f32 %v123, %v131
    %v158 = vmul.f32 %v156, %v154
    %v159 = vmul.f32 %v157, %v155
    %v161 = vlaneseq
    %v162 = vshrl.u32 %v161, 7
    %v163 = vsub.s32 0, %v162
    %v164 = vrot.slane %v125, %v163
    %v166 = vadd.f32 %v158, %v164
    %v167 = vadd.f32 %v159, %v164
    %v168 = vpack.c.bf16 %v167, %v166
    %v169 = vld [vmem:[#allocation5] sm:$0xff]
    %v170 = vld [vmem:[#allocation5 + $0x8] sm:$0xff]
    %v171 = vld [vmem:[#allocation5 + $0x10] sm:$0xff]
    %v172 = vld [vmem:[#allocation5 + $0x18] sm:$0xff]
    %v173 = vld [vmem:[#allocation5 + $0x20] sm:$0xff]
    %v174 = vld [vmem:[#allocation5 + $0x28] sm:$0xff]
    %v175 = vld [vmem:[#allocation5 + $0x30] sm:$0xff]
    %v176 = vld [vmem:[#allocation5 + $0x38] sm:$0xff]
    %v177 = vld [vmem:[#allocation5 + $0x40] sm:$0xff]
    %v178 = vld [vmem:[#allocation5 + $0x48] sm:$0xff]
    %v179 = vld [vmem:[#allocation5 + $0x50] sm:$0xff]
    %v180 = vld [vmem:[#allocation5 + $0x58] sm:$0xff]
    %v181 = vld [vmem:[#allocation5 + $0x60] sm:$0xff]
    %v182 = vld [vmem:[#allocation5 + $0x68] sm:$0xff]
    %v183 = vld [vmem:[#allocation5 + $0x70] sm:$0xff]
    %v184 = vld [vmem:[#allocation5 + $0x78] sm:$0xff]
    %v185 = vld [vmem:[#allocation5 + $0x80] sm:$0xff]
    %v186 = vld [vmem:[#allocation5 + $0x88] sm:$0xff]
    %v187 = vld [vmem:[#allocation5 + $0x90] sm:$0xff]
    %v188 = vld [vmem:[#allocation5 + $0x98] sm:$0xff]
    %v189 = vld [vmem:[#allocation5 + $0xa0] sm:$0xff]
    %v190 = vld [vmem:[#allocation5 + $0xa8] sm:$0xff]
    %v191 = vld [vmem:[#allocation5 + $0xb0] sm:$0xff]
    %v192 = vld [vmem:[#allocation5 + $0xb8] sm:$0xff]
    %v193 = vld [vmem:[#allocation5 + $0xc0] sm:$0xff]
    %v194 = vld [vmem:[#allocation5 + $0xc8] sm:$0xff]
    %v195 = vld [vmem:[#allocation5 + $0xd0] sm:$0xff]
    %v196 = vld [vmem:[#allocation5 + $0xd8] sm:$0xff]
    %v197 = vld [vmem:[#allocation5 + $0xe0] sm:$0xff]
    %v198 = vld [vmem:[#allocation5 + $0xe8] sm:$0xff]
    %v199 = vld [vmem:[#allocation5 + $0xf0] sm:$0xff]
    %v200 = vld [vmem:[#allocation5 + $0xf8] sm:$0xff]
    %v201 = vld [vmem:[%s6] sm:$0xf]
    %v203 = vlaneseq
    %v204 = vshrl.u32 %v203, 7
    %v205 = vsub.s32 0, %v204
    %v206 = vrot.slane %v201, %v205
    %v207 = vlaneseq
    %v208 = vshrl.u32 %v207, 7
    %v209 = vsub.s32 1, %v208
    %v210 = vrot.slane %v201, %v209
    %v211 = vlaneseq
    %v212 = vshrl.u32 %v211, 7
    %v213 = vsub.s32 2, %v212
    %v214 = vrot.slane %v201, %v213
    %v215 = vlaneseq
    %v216 = vshrl.u32 %v215, 7
    %v217 = vsub.s32 3, %v216
    %v218 = vrot.slane %v201, %v217
    %v255 = vunpack.c.l.b16 %v169
    %v256 = vunpack.c.h.b16 %v169
    %v257 = vunpack.c.l.b16 %v170
    %v258 = vunpack.c.h.b16 %v170
    %v259 = vunpack.c.l.b16 %v171
    %v260 = vunpack.c.h.b16 %v171
    %v261 = vunpack.c.l.b16 %v172
    %v262 = vunpack.c.h.b16 %v172
    %v263 = vunpack.c.l.b16 %v173
    %v264 = vunpack.c.h.b16 %v173
    %v265 = vunpack.c.l.b16 %v174
    %v266 = vunpack.c.h.b16 %v174
    %v267 = vunpack.c.l.b16 %v175
    %v268 = vunpack.c.h.b16 %v175
    %v269 = vunpack.c.l.b16 %v176
    %v270 = vunpack.c.h.b16 %v176
    %v271 = vunpack.c.l.b16 %v177
    %v272 = vunpack.c.h.b16 %v177
    %v273 = vunpack.c.l.b16 %v178
    %v274 = vunpack.c.h.b16 %v178
    %v275 = vunpack.c.l.b16 %v179
    %v276 = vunpack.c.h.b16 %v179
    %v277 = vunpack.c.l.b16 %v180
    %v278 = vunpack.c.h.b16 %v180
    %v279 = vunpack.c.l.b16 %v181
    %v280 = vunpack.c.h.b16 %v181
    %v281 = vunpack.c.l.b16 %v182
    %v282 = vunpack.c.h.b16 %v182
    %v283 = vunpack.c.l.b16 %v183
    %v284 = vunpack.c.h.b16 %v183
    %v285 = vunpack.c.l.b16 %v184
    %v286 = vunpack.c.h.b16 %v184
    %v287 = vunpack.c.l.b16 %v185
    %v288 = vunpack.c.h.b16 %v185
    %v289 = vunpack.c.l.b16 %v186
    %v290 = vunpack.c.h.b16 %v186
    %v291 = vunpack.c.l.b16 %v187
    %v292 = vunpack.c.h.b16 %v187
    %v293 = vunpack.c.l.b16 %v188
    %v294 = vunpack.c.h.b16 %v188
    %v295 = vunpack.c.l.b16 %v189
    %v296 = vunpack.c.h.b16 %v189
    %v297 = vunpack.c.l.b16 %v190
    %v298 = vunpack.c.h.b16 %v190
    %v299 = vunpack.c.l.b16 %v191
    %v300 = vunpack.c.h.b16 %v191
    %v301 = vunpack.c.l.b16 %v192
    %v302 = vunpack.c.h.b16 %v192
    %v303 = vunpack.c.l.b16 %v193
    %v304 = vunpack.c.h.b16 %v193
    %v305 = vunpack.c.l.b16 %v194
    %v306 = vunpack.c.h.b16 %v194
    %v307 = vunpack.c.l.b16 %v195
    %v308 = vunpack.c.h.b16 %v195
    %v309 = vunpack.c.l.b16 %v196
    %v310 = vunpack.c.h.b16 %v196
    %v311 = vunpack.c.l.b16 %v197
    %v312 = vunpack.c.h.b16 %v197
    %v313 = vunpack.c.l.b16 %v198
    %v314 = vunpack.c.h.b16 %v198
    %v315 = vunpack.c.l.b16 %v199
    %v316 = vunpack.c.h.b16 %v199
    %v317 = vunpack.c.l.b16 %v200
    %v318 = vunpack.c.h.b16 %v200
    %v319 = vpack.c.b16 %v259, %v255
    %v320 = vpack.c.b16 %v260, %v256
    %v321 = vpack.c.b16 %v261, %v257
    %v322 = vpack.c.b16 %v262, %v258
    %v323 = vpack.c.b16 %v267, %v263
    %v324 = vpack.c.b16 %v268, %v264
    %v325 = vpack.c.b16 %v269, %v265
    %v326 = vpack.c.b16 %v270, %v266
    %v327 = vpack.c.b16 %v275, %v271
    %v328 = vpack.c.b16 %v276, %v272
    %v329 = vpack.c.b16 %v277, %v273
    %v330 = vpack.c.b16 %v278, %v274
    %v331 = vpack.c.b16 %v283, %v279
    %v332 = vpack.c.b16 %v284, %v280
    %v333 = vpack.c.b16 %v285, %v281
    %v334 = vpack.c.b16 %v286, %v282
    %v335 = vpack.c.b16 %v291, %v287
    %v336 = vpack.c.b16 %v292, %v288
    %v337 = vpack.c.b16 %v293, %v289
    %v338 = vpack.c.b16 %v294, %v290
    %v339 = vpack.c.b16 %v299, %v295
    %v340 = vpack.c.b16 %v300, %v296
    %v341 = vpack.c.b16 %v301, %v297
    %v342 = vpack.c.b16 %v302, %v298
    %v343 = vpack.c.b16 %v307, %v303
    %v344 = vpack.c.b16 %v308, %v304
    %v345 = vpack.c.b16 %v309, %v305
    %v346 = vpack.c.b16 %v310, %v306
    %v347 = vpack.c.b16 %v315, %v311
    %v348 = vpack.c.b16 %v316, %v312
    %v349 = vpack.c.b16 %v317, %v313
    %v350 = vpack.c.b16 %v318, %v314
    %383 = vmatprep.subr.bf16.mxu0 %v320
    %384 = vmatpush1.bf16.msra.mxu0 %v319
    %385 = vmatprep.subr.bf16.mxu0 %v324
    %386 = vmatpush1.bf16.msra.mxu0 %v323
    %387 = vmatprep.subr.bf16.mxu0 %v328
    %388 = vmatpush1.bf16.msra.mxu0 %v327
    %389 = vmatprep.subr.bf16.mxu0 %v332
    %390 = vmatpush1.bf16.msra.mxu0 %v331
    %391 = vmatprep.subr.bf16.mxu0 %v336
    %392 = vmatpush1.bf16.msra.mxu0 %v335
    %393 = vmatprep.subr.bf16.mxu0 %v340
    %394 = vmatpush1.bf16.msra.mxu0 %v339
    %395 = vmatprep.subr.bf16.mxu0 %v344
    %396 = vmatpush1.bf16.msra.mxu0 %v343
    %397 = vmatprep.subr.bf16.mxu0 %v348
    %398 = vmatpush1.bf16.msra.mxu0 %v347
    %399 = vmatprep.subr.bf16.mxu0 0
    %400 = vmatpush1.bf16.msra.mxu0 0
    %401 = vmatprep.subr.bf16.mxu0 0
    %402 = vmatpush1.bf16.msra.mxu0 0
    %403 = vmatprep.subr.bf16.mxu0 0
    %404 = vmatpush1.bf16.msra.mxu0 0
    %405 = vmatprep.subr.bf16.mxu0 0
    %406 = vmatpush1.bf16.msra.mxu0 0
    %407 = vmatprep.subr.bf16.mxu0 0
    %408 = vmatpush1.bf16.msra.mxu0 0
    %409 = vmatprep.subr.bf16.mxu0 0
    %410 = vmatpush1.bf16.msra.mxu0 0
    %411 = vmatprep.subr.bf16.mxu0 0
    %412 = vmatpush1.bf16.msra.mxu0 0
    %413 = vmatprep.subr.bf16.mxu0 0
    %414 = vmatpush1.bf16.msra.mxu0 0
    %415 = vmatprep.mubr.bf16.mxu0 0
    %416 = vmatmul.mubr.bf16.gmra.mrb[0].mxu0 %v168
    %v417 = vpop.f32.mrb[0].mxu0
    %v418 = vadd.f32 %v206, %v417
    %v419 = vpop.f32.mrb[0].mxu0
    %v420 = vadd.f32 %v210, %v419
    %v421 = vpop.f32.mrb[0].mxu0
    %v422 = vadd.f32 %v206, %v421
    %v423 = vpop.f32.mrb[0].mxu0
    %v424 = vadd.f32 %v210, %v423
    %425 = vdwg.mxu0
    %426 = vmatprep.subr.bf16.mxu0 %v322
    %427 = vmatpush1.bf16.msra.mxu0 %v321
    %428 = vmatprep.subr.bf16.mxu0 %v326
    %429 = vmatpush1.bf16.msra.mxu0 %v325
    %430 = vmatprep.subr.bf16.mxu0 %v330
    %431 = vmatpush1.bf16.msra.mxu0 %v329
    %432 = vmatprep.subr.bf16.mxu0 %v334
    %433 = vmatpush1.bf16.msra.mxu0 %v333
    %434 = vmatprep.subr.bf16.mxu0 %v338
    %435 = vmatpush1.bf16.msra.mxu0 %v337
    %436 = vmatprep.subr.bf16.mxu0 %v342
    %437 = vmatpush1.bf16.msra.mxu0 %v341
    %438 = vmatprep.subr.bf16.mxu0 %v346
    %439 = vmatpush1.bf16.msra.mxu0 %v345
    %440 = vmatprep.subr.bf16.mxu0 %v350
    %441 = vmatpush1.bf16.msra.mxu0 %v349
    %442 = vmatprep.subr.bf16.mxu0 0
    %443 = vmatpush1.bf16.msra.mxu0 0
    %444 = vmatprep.subr.bf16.mxu0 0
    %445 = vmatpush1.bf16.msra.mxu0 0
    %446 = vmatprep.subr.bf16.mxu0 0
    %447 = vmatpush1.bf16.msra.mxu0 0
    %448 = vmatprep.subr.bf16.mxu0 0
    %449 = vmatpush1.bf16.msra.mxu0 0
    %450 = vmatprep.subr.bf16.mxu0 0
    %451 = vmatpush1.bf16.msra.mxu0 0
    %452 = vmatprep.subr.bf16.mxu0 0
    %453 = vmatpush1.bf16.msra.mxu0 0
    %454 = vmatprep.subr.bf16.mxu0 0
    %455 = vmatpush1.bf16.msra.mxu0 0
    %456 = vmatprep.subr.bf16.mxu0 0
    %457 = vmatpush1.bf16.msra.mxu0 0
    %458 = vmatprep.mubr.bf16.mxu0 0
    %459 = vmatmul.mubr.bf16.gmra.mrb[0].mxu0 %v168
    %v460 = vpop.f32.mrb[0].mxu0
    %v461 = vadd.f32 %v214, %v460
    %v462 = vpop.f32.mrb[0].mxu0
    %v463 = vadd.f32 %v218, %v462
    %v464 = vpop.f32.mrb[0].mxu0
    %v465 = vadd.f32 %v214, %v464
    %v466 = vpop.f32.mrb[0].mxu0
    %v467 = vadd.f32 %v218, %v466
    %468 = vdwg.mxu0
    %v469 = vmul.f32 %v418, 0.5
    %v470 = vmul.f32 %v420, 0.5
    %v471 = vmul.f32 %v461, 0.5
    %v472 = vmul.f32 %v463, 0.5
    %v473 = vmul.f32 %v422, 0.5
    %v474 = vmul.f32 %v424, 0.5
    %v475 = vmul.f32 %v465, 0.5
    %v476 = vmul.f32 %v467, 0.5
    %v477 = vrcp.pop 1.4142135
    %v478 = vmul.f32 %v418, %v477
    %v479 = vmul.f32 %v420, %v477
    %v480 = vmul.f32 %v461, %v477
    %v481 = vmul.f32 %v463, %v477
    %v482 = vmul.f32 %v422, %v477
    %v483 = vmul.f32 %v424, %v477
    %v484 = vmul.f32 %v465, %v477
    %v485 = vmul.f32 %v467, %v477
    %v486 = vand.u32 2147483647, %v478
    %v487 = vand.u32 2147483647, %v479
    %v488 = vand.u32 2147483647, %v480
    %v489 = vand.u32 2147483647, %v481
    %v490 = vand.u32 2147483647, %v482
    %v491 = vand.u32 2147483647, %v483
    %v492 = vand.u32 2147483647, %v484
    %v493 = vand.u32 2147483647, %v485
    %v494 = vmul.f32 %v486, 0.3275911
    %v495 = vmul.f32 %v487, 0.3275911
    %v496 = vmul.f32 %v488, 0.3275911
    %v497 = vmul.f32 %v489, 0.3275911
    %v498 = vmul.f32 %v490, 0.3275911
    %v499 = vmul.f32 %v491, 0.3275911
    %v500 = vmul.f32 %v492, 0.3275911
    %v501 = vmul.f32 %v493, 0.3275911
    %v502 = vadd.f32 %v494, 1.0
    %v503 = vadd.f32 %v495, 1.0
    %v504 = vadd.f32 %v496, 1.0
    %v505 = vadd.f32 %v497, 1.0
    %v506 = vadd.f32 %v498, 1.0
    %v507 = vadd.f32 %v499, 1.0
    %v508 = vadd.f32 %v500, 1.0
    %v509 = vadd.f32 %v501, 1.0
    %v510 = vrcp.pop %v502
    %v511 = vmul.f32 1.0, %v510
    %v512 = vrcp.pop %v503
    %v513 = vmul.f32 1.0, %v512
    %v514 = vrcp.pop %v504
    %v515 = vmul.f32 1.0, %v514
    %v516 = vrcp.pop %v505
    %v517 = vmul.f32 1.0, %v516
    %v518 = vrcp.pop %v506
    %v519 = vmul.f32 1.0, %v518
    %v520 = vrcp.pop %v507
    %v521 = vmul.f32 1.0, %v520
    %v522 = vrcp.pop %v508
    %v523 = vmul.f32 1.0, %v522
    %v524 = vrcp.pop %v509
    %v525 = vmul.f32 1.0, %v524
    %v526 = vmul.f32 %v511, 1.0614054
    %v527 = vmul.f32 %v513, 1.0614054
    %v528 = vmul.f32 %v515, 1.0614054
    %v529 = vmul.f32 %v517, 1.0614054
    %v530 = vmul.f32 %v519, 1.0614054
    %v531 = vmul.f32 %v521, 1.0614054
    %v532 = vmul.f32 %v523, 1.0614054
    %v533 = vmul.f32 %v525, 1.0614054
    %v534 = vadd.f32 %v526, -1.4531521
    %v535 = vadd.f32 %v527, -1.4531521
    %v536 = vadd.f32 %v528, -1.4531521
    %v537 = vadd.f32 %v529, -1.4531521
    %v538 = vadd.f32 %v530, -1.4531521
    %v539 = vadd.f32 %v531, -1.4531521
    %v540 = vadd.f32 %v532, -1.4531521
    %v541 = vadd.f32 %v533, -1.4531521
    %v542 = vmul.f32 %v511, %v534
    %v543 = vmul.f32 %v513, %v535
    %v544 = vmul.f32 %v515, %v536
    %v545 = vmul.f32 %v517, %v537
    %v546 = vmul.f32 %v519, %v538
    %v547 = vmul.f32 %v521, %v539
    %v548 = vmul.f32 %v523, %v540
    %v549 = vmul.f32 %v525, %v541
    %v550 = vadd.f32 %v542, 1.4214138
    %v551 = vadd.f32 %v543, 1.4214138
    %v552 = vadd.f32 %v544, 1.4214138
    %v553 = vadd.f32 %v545, 1.4214138
    %v554 = vadd.f32 %v546, 1.4214138
    %v555 = vadd.f32 %v547, 1.4214138
    %v556 = vadd.f32 %v548, 1.4214138
    %v557 = vadd.f32 %v549, 1.4214138
    %v558 = vmul.f32 %v511, %v550
    %v559 = vmul.f32 %v513, %v551
    %v560 = vmul.f32 %v515, %v552
    %v561 = vmul.f32 %v517, %v553
    %v562 = vmul.f32 %v519, %v554
    %v563 = vmul.f32 %v521, %v555
    %v564 = vmul.f32 %v523, %v556
    %v565 = vmul.f32 %v525, %v557
    %v566 = vadd.f32 %v558, -0.28449672
    %v567 = vadd.f32 %v559, -0.28449672
    %v568 = vadd.f32 %v560, -0.28449672
    %v569 = vadd.f32 %v561, -0.28449672
    %v570 = vadd.f32 %v562, -0.28449672
    %v571 = vadd.f32 %v563, -0.28449672
    %v572 = vadd.f32 %v564, -0.28449672
    %v573 = vadd.f32 %v565, -0.28449672
    %v574 = vmul.f32 %v511, %v566
    %v575 = vmul.f32 %v513, %v567
    %v576 = vmul.f32 %v515, %v568
    %v577 = vmul.f32 %v517, %v569
    %v578 = vmul.f32 %v519, %v570
    %v579 = vmul.f32 %v521, %v571
    %v580 = vmul.f32 %v523, %v572
    %v581 = vmul.f32 %v525, %v573
    %v582 = vadd.f32 %v574, 0.2548296
    %v583 = vadd.f32 %v575, 0.2548296
    %v584 = vadd.f32 %v576, 0.2548296
    %v585 = vadd.f32 %v577, 0.2548296
    %v586 = vadd.f32 %v578, 0.2548296
    %v587 = vadd.f32 %v579, 0.2548296
    %v588 = vadd.f32 %v580, 0.2548296
    %v589 = vadd.f32 %v581, 0.2548296
    %v590 = vmul.f32 %v511, %v582
    %v591 = vmul.f32 %v513, %v583
    %v592 = vmul.f32 %v515, %v584
    %v593 = vmul.f32 %v517, %v585
    %v594 = vmul.f32 %v519, %v586
    %v595 = vmul.f32 %v521, %v587
    %v596 = vmul.f32 %v523, %v588
    %v597 = vmul.f32 %v525, %v589
    %v598 = vsub.f32 0.0, %v486
    %v599 = vsub.f32 0.0, %v487
    %v600 = vsub.f32 0.0, %v488
    %v601 = vsub.f32 0.0, %v489
    %v602 = vsub.f32 0.0, %v490
    %v603 = vsub.f32 0.0, %v491
    %v604 = vsub.f32 0.0, %v492
    %v605 = vsub.f32 0.0, %v493
    %v606 = vmul.f32 %v598, %v486
    %v607 = vmul.f32 %v599, %v487
    %v608 = vmul.f32 %v600, %v488
    %v609 = vmul.f32 %v601, %v489
    %v610 = vmul.f32 %v602, %v490
    %v611 = vmul.f32 %v603, %v491
    %v612 = vmul.f32 %v604, %v492
    %v613 = vmul.f32 %v605, %v493
    %v614 = vmul.f32 %v606, 1.442695
    %v615 = vpow.pop %v614
    %v616 = vmul.f32 %v607, 1.442695
    %v617 = vpow.pop %v616
    %v618 = vmul.f32 %v608, 1.442695
    %v619 = vpow.pop %v618
    %v620 = vmul.f32 %v609, 1.442695
    %v621 = vpow.pop %v620
    %v622 = vmul.f32 %v610, 1.442695
    %v623 = vpow.pop %v622
    %v624 = vmul.f32 %v611, 1.442695
    %v625 = vpow.pop %v624
    %v626 = vmul.f32 %v612, 1.442695
    %v627 = vpow.pop %v626
    %v628 = vmul.f32 %v613, 1.442695
    %v629 = vpow.pop %v628
    %v630 = vmul.f32 %v590, %v615
    %v631 = vmul.f32 %v591, %v617
    %v632 = vmul.f32 %v592, %v619
    %v633 = vmul.f32 %v593, %v621
    %v634 = vmul.f32 %v594, %v623
    %v635 = vmul.f32 %v595, %v625
    %v636 = vmul.f32 %v596, %v627
    %v637 = vmul.f32 %v597, %v629
    %v638 = vsub.f32 1.0, %v630
    %v639 = vsub.f32 1.0, %v631
    %v640 = vsub.f32 1.0, %v632
    %v641 = vsub.f32 1.0, %v633
    %v642 = vsub.f32 1.0, %v634
    %v643 = vsub.f32 1.0, %v635
    %v644 = vsub.f32 1.0, %v636
    %v645 = vsub.f32 1.0, %v637
    %vm646 = vcmp.ge.f32.partialorder %v478, 0.0
    %vm647 = vcmp.ge.f32.partialorder %v479, 0.0
    %vm648 = vcmp.ge.f32.partialorder %v480, 0.0
    %vm649 = vcmp.ge.f32.partialorder %v481, 0.0
    %vm650 = vcmp.ge.f32.partialorder %v482, 0.0
    %vm651 = vcmp.ge.f32.partialorder %v483, 0.0
    %vm652 = vcmp.ge.f32.partialorder %v484, 0.0
    %vm653 = vcmp.ge.f32.partialorder %v485, 0.0
    %v654 = vsub.f32 0.0, %v638
    %v655 = vsub.f32 0.0, %v639
    %v656 = vsub.f32 0.0, %v640
    %v657 = vsub.f32 0.0, %v641
    %v658 = vsub.f32 0.0, %v642
    %v659 = vsub.f32 0.0, %v643
    %v660 = vsub.f32 0.0, %v644
    %v661 = vsub.f32 0.0, %v645
    %v662 = vsel %vm646, %v638, %v654
    %v663 = vsel %vm647, %v639, %v655
    %v664 = vsel %vm648, %v640, %v656
    %v665 = vsel %vm649, %v641, %v657
    %v666 = vsel %vm650, %v642, %v658
    %v667 = vsel %vm651, %v643, %v659
    %v668 = vsel %vm652, %v644, %v660
    %v669 = vsel %vm653, %v645, %v661
    %v670 = vadd.f32 %v662, 1.0
    %v671 = vadd.f32 %v663, 1.0
    %v672 = vadd.f32 %v664, 1.0
    %v673 = vadd.f32 %v665, 1.0
    %v674 = vadd.f32 %v666, 1.0
    %v675 = vadd.f32 %v667, 1.0
    %v676 = vadd.f32 %v668, 1.0
    %v677 = vadd.f32 %v669, 1.0
    %v678 = vmul.f32 %v469, %v670
    %v679 = vmul.f32 %v470, %v671
    %v680 = vmul.f32 %v471, %v672
    %v681 = vmul.f32 %v472, %v673
    %v682 = vmul.f32 %v473, %v674
    %v683 = vmul.f32 %v474, %v675
    %v684 = vmul.f32 %v475, %v676
    %v685 = vmul.f32 %v476, %v677
    %v686 = vpack.c.bf16 %v682, %v678
    %v687 = vpack.c.bf16 %v683, %v679
    %v688 = vpack.c.bf16 %v684, %v680
    %v689 = vpack.c.bf16 %v685, %v681
    %v690 = vld [vmem:[#allocation7] sm:$0xf]
    %v691 = vld [vmem:[#allocation7 + $0x4] sm:$0xf]
    %v692 = vld [vmem:[#allocation7 + $0x8] sm:$0xf]
    %v693 = vld [vmem:[#allocation7 + $0xc] sm:$0xf]
    %v694 = vld [vmem:[#allocation7 + $0x10] sm:$0xf]
    %v695 = vld [vmem:[#allocation7 + $0x14] sm:$0xf]
    %v696 = vld [vmem:[#allocation7 + $0x18] sm:$0xf]
    %v697 = vld [vmem:[#allocation7 + $0x1c] sm:$0xf]
    %v698 = vld [vmem:[#allocation7 + $0x20] sm:$0xf]
    %v699 = vld [vmem:[#allocation7 + $0x24] sm:$0xf]
    %v700 = vld [vmem:[#allocation7 + $0x28] sm:$0xf]
    %v701 = vld [vmem:[#allocation7 + $0x2c] sm:$0xf]
    %v702 = vld [vmem:[#allocation7 + $0x30] sm:$0xf]
    %v703 = vld [vmem:[#allocation7 + $0x34] sm:$0xf]
    %v704 = vld [vmem:[#allocation7 + $0x38] sm:$0xf]
    %v705 = vld [vmem:[#allocation7 + $0x3c] sm:$0xf]
    %v706 = vld [vmem:[#allocation7 + $0x40] sm:$0xf]
    %v707 = vld [vmem:[#allocation7 + $0x44] sm:$0xf]
    %v708 = vld [vmem:[#allocation7 + $0x48] sm:$0xf]
    %v709 = vld [vmem:[#allocation7 + $0x4c] sm:$0xf]
    %v710 = vld [vmem:[#allocation7 + $0x50] sm:$0xf]
    %v711 = vld [vmem:[#allocation7 + $0x54] sm:$0xf]
    %v712 = vld [vmem:[#allocation7 + $0x58] sm:$0xf]
    %v713 = vld [vmem:[#allocation7 + $0x5c] sm:$0xf]
    %v714 = vld [vmem:[#allocation7 + $0x60] sm:$0xf]
    %v715 = vld [vmem:[#allocation7 + $0x64] sm:$0xf]
    %v716 = vld [vmem:[#allocation7 + $0x68] sm:$0xf]
    %v717 = vld [vmem:[#allocation7 + $0x6c] sm:$0xf]
    %v718 = vld [vmem:[#allocation7 + $0x70] sm:$0xf]
    %v719 = vld [vmem:[#allocation7 + $0x74] sm:$0xf]
    %v720 = vld [vmem:[#allocation7 + $0x78] sm:$0xf]
    %v721 = vld [vmem:[#allocation7 + $0x7c] sm:$0xf]
    %v722 = vld [vmem:[#allocation7 + $0x80] sm:$0xf]
    %v723 = vld [vmem:[#allocation7 + $0x84] sm:$0xf]
    %v724 = vld [vmem:[#allocation7 + $0x88] sm:$0xf]
    %v725 = vld [vmem:[#allocation7 + $0x8c] sm:$0xf]
    %v726 = vld [vmem:[#allocation7 + $0x90] sm:$0xf]
    %v727 = vld [vmem:[#allocation7 + $0x94] sm:$0xf]
    %v728 = vld [vmem:[#allocation7 + $0x98] sm:$0xf]
    %v729 = vld [vmem:[#allocation7 + $0x9c] sm:$0xf]
    %v730 = vld [vmem:[#allocation7 + $0xa0] sm:$0xf]
    %v731 = vld [vmem:[#allocation7 + $0xa4] sm:$0xf]
    %v732 = vld [vmem:[#allocation7 + $0xa8] sm:$0xf]
    %v733 = vld [vmem:[#allocation7 + $0xac] sm:$0xf]
    %v734 = vld [vmem:[#allocation7 + $0xb0] sm:$0xf]
    %v735 = vld [vmem:[#allocation7 + $0xb4] sm:$0xf]
    %v736 = vld [vmem:[#allocation7 + $0xb8] sm:$0xf]
    %v737 = vld [vmem:[#allocation7 + $0xbc] sm:$0xf]
    %v738 = vld [vmem:[#allocation7 + $0xc0] sm:$0xf]
    %v739 = vld [vmem:[#allocation7 + $0xc4] sm:$0xf]
    %v740 = vld [vmem:[#allocation7 + $0xc8] sm:$0xf]
    %v741 = vld [vmem:[#allocation7 + $0xcc] sm:$0xf]
    %v742 = vld [vmem:[#allocation7 + $0xd0] sm:$0xf]
    %v743 = vld [vmem:[#allocation7 + $0xd4] sm:$0xf]
    %v744 = vld [vmem:[#allocation7 + $0xd8] sm:$0xf]
    %v745 = vld [vmem:[#allocation7 + $0xdc] sm:$0xf]
    %v746 = vld [vmem:[#allocation7 + $0xe0] sm:$0xf]
    %v747 = vld [vmem:[#allocation7 + $0xe4] sm:$0xf]
    %v748 = vld [vmem:[#allocation7 + $0xe8] sm:$0xf]
    %v749 = vld [vmem:[#allocation7 + $0xec] sm:$0xf]
    %v750 = vld [vmem:[#allocation7 + $0xf0] sm:$0xf]
    %v751 = vld [vmem:[#allocation7 + $0xf4] sm:$0xf]
    %v752 = vld [vmem:[#allocation7 + $0xf8] sm:$0xf]
    %v753 = vld [vmem:[#allocation7 + $0xfc] sm:$0xf]
    %v818 = vunpack.c.l.b16 %v690
    %v819 = vunpack.c.l.b16 %v691
    %v820 = vunpack.c.l.b16 %v692
    %v821 = vunpack.c.l.b16 %v693
    %v822 = vunpack.c.l.b16 %v694
    %v823 = vunpack.c.l.b16 %v695
    %v824 = vunpack.c.l.b16 %v696
    %v825 = vunpack.c.l.b16 %v697
    %v826 = vunpack.c.l.b16 %v698
    %v827 = vunpack.c.l.b16 %v699
    %v828 = vunpack.c.l.b16 %v700
    %v829 = vunpack.c.l.b16 %v701
    %v830 = vunpack.c.l.b16 %v702
    %v831 = vunpack.c.l.b16 %v703
    %v832 = vunpack.c.l.b16 %v704
    %v833 = vunpack.c.l.b16 %v705
    %v834 = vunpack.c.l.b16 %v706
    %v835 = vunpack.c.l.b16 %v707
    %v836 = vunpack.c.l.b16 %v708
    %v837 = vunpack.c.l.b16 %v709
    %v838 = vunpack.c.l.b16 %v710
    %v839 = vunpack.c.l.b16 %v711
    %v840 = vunpack.c.l.b16 %v712
    %v841 = vunpack.c.l.b16 %v713
    %v842 = vunpack.c.l.b16 %v714
    %v843 = vunpack.c.l.b16 %v715
    %v844 = vunpack.c.l.b16 %v716
    %v845 = vunpack.c.l.b16 %v717
    %v846 = vunpack.c.l.b16 %v718
    %v847 = vunpack.c.l.b16 %v719
    %v848 = vunpack.c.l.b16 %v720
    %v849 = vunpack.c.l.b16 %v721
    %v850 = vunpack.c.l.b16 %v722
    %v851 = vunpack.c.l.b16 %v723
    %v852 = vunpack.c.l.b16 %v724
    %v853 = vunpack.c.l.b16 %v725
    %v854 = vunpack.c.l.b16 %v726
    %v855 = vunpack.c.l.b16 %v727
    %v856 = vunpack.c.l.b16 %v728
    %v857 = vunpack.c.l.b16 %v729
    %v858 = vunpack.c.l.b16 %v730
    %v859 = vunpack.c.l.b16 %v731
    %v860 = vunpack.c.l.b16 %v732
    %v861 = vunpack.c.l.b16 %v733
    %v862 = vunpack.c.l.b16 %v734
    %v863 = vunpack.c.l.b16 %v735
    %v864 = vunpack.c.l.b16 %v736
    %v865 = vunpack.c.l.b16 %v737
    %v866 = vunpack.c.l.b16 %v738
    %v867 = vunpack.c.l.b16 %v739
    %v868 = vunpack.c.l.b16 %v740
    %v869 = vunpack.c.l.b16 %v741
    %v870 = vunpack.c.l.b16 %v742
    %v871 = vunpack.c.l.b16 %v743
    %v872 = vunpack.c.l.b16 %v744
    %v873 = vunpack.c.l.b16 %v745
    %v874 = vunpack.c.l.b16 %v746
    %v875 = vunpack.c.l.b16 %v747
    %v876 = vunpack.c.l.b16 %v748
    %v877 = vunpack.c.l.b16 %v749
    %v878 = vunpack.c.l.b16 %v750
    %v879 = vunpack.c.l.b16 %v751
    %v880 = vunpack.c.l.b16 %v752
    %v881 = vunpack.c.l.b16 %v753
    %v882 = vpack.c.b16 %v819, %v818
    %v883 = vpack.c.b16 %v821, %v820
    %v884 = vpack.c.b16 %v823, %v822
    %v885 = vpack.c.b16 %v825, %v824
    %v886 = vpack.c.b16 %v827, %v826
    %v887 = vpack.c.b16 %v829, %v828
    %v888 = vpack.c.b16 %v831, %v830
    %v889 = vpack.c.b16 %v833, %v832
    %v890 = vpack.c.b16 %v835, %v834
    %v891 = vpack.c.b16 %v837, %v836
    %v892 = vpack.c.b16 %v839, %v838
    %v893 = vpack.c.b16 %v841, %v840
    %v894 = vpack.c.b16 %v843, %v842
    %v895 = vpack.c.b16 %v845, %v844
    %v896 = vpack.c.b16 %v847, %v846
    %v897 = vpack.c.b16 %v849, %v848
    %v898 = vpack.c.b16 %v851, %v850
    %v899 = vpack.c.b16 %v853, %v852
    %v900 = vpack.c.b16 %v855, %v854
    %v901 = vpack.c.b16 %v857, %v856
    %v902 = vpack.c.b16 %v859, %v858
    %v903 = vpack.c.b16 %v861, %v860
    %v904 = vpack.c.b16 %v863, %v862
    %v905 = vpack.c.b16 %v865, %v864
    %v906 = vpack.c.b16 %v867, %v866
    %v907 = vpack.c.b16 %v869, %v868
    %v908 = vpack.c.b16 %v871, %v870
    %v909 = vpack.c.b16 %v873, %v872
    %v910 = vpack.c.b16 %v875, %v874
    %v911 = vpack.c.b16 %v877, %v876
    %v912 = vpack.c.b16 %v879, %v878
    %v913 = vpack.c.b16 %v881, %v880
    %946 = vmatprep.subr.bf16.mxu0 0
    %947 = vmatpush1.bf16.msra.mxu0 %v882
    %948 = vmatprep.subr.bf16.mxu0 0
    %949 = vmatpush1.bf16.msra.mxu0 %v883
    %950 = vmatprep.subr.bf16.mxu0 0
    %951 = vmatpush1.bf16.msra.mxu0 %v884
    %952 = vmatprep.subr.bf16.mxu0 0
    %953 = vmatpush1.bf16.msra.mxu0 %v885
    %954 = vmatprep.subr.bf16.mxu0 0
    %955 = vmatpush1.bf16.msra.mxu0 %v886
    %956 = vmatprep.subr.bf16.mxu0 0
    %957 = vmatpush1.bf16.msra.mxu0 %v887
    %958 = vmatprep.subr.bf16.mxu0 0
    %959 = vmatpush1.bf16.msra.mxu0 %v888
    %960 = vmatprep.subr.bf16.mxu0 0
    %961 = vmatpush1.bf16.msra.mxu0 %v889
    %962 = vmatprep.subr.bf16.mxu0 0
    %963 = vmatpush1.bf16.msra.mxu0 %v890
    %964 = vmatprep.subr.bf16.mxu0 0
    %965 = vmatpush1.bf16.msra.mxu0 %v891
    %966 = vmatprep.subr.bf16.mxu0 0
    %967 = vmatpush1.bf16.msra.mxu0 %v892
    %968 = vmatprep.subr.bf16.mxu0 0
    %969 = vmatpush1.bf16.msra.mxu0 %v893
    %970 = vmatprep.subr.bf16.mxu0 0
    %971 = vmatpush1.bf16.msra.mxu0 %v894
    %972 = vmatprep.subr.bf16.mxu0 0
    %973 = vmatpush1.bf16.msra.mxu0 %v895
    %974 = vmatprep.subr.bf16.mxu0 0
    %975 = vmatpush1.bf16.msra.mxu0 %v896
    %976 = vmatprep.subr.bf16.mxu0 0
    %977 = vmatpush1.bf16.msra.mxu0 %v897
    %978 = vmatprep.mubr.bf16.mxu0 %v687
    %979 = vmatmul.mubr.bf16.gmra.mrb[0].mxu0 %v686
    %v980 = vpop.f32.mrb[0].mxu0
    %v981 = vadd.f32 0.0, %v980
    %v982 = vpop.f32.mrb[0].mxu0
    %v983 = vpop.f32.mrb[0].mxu0
    %v984 = vadd.f32 0.0, %v983
    %v985 = vpop.f32.mrb[0].mxu0
    %986 = vdwg.mxu0
    %987 = vmatprep.subr.bf16.mxu0 0
    %988 = vmatpush1.bf16.msra.mxu0 %v898
    %989 = vmatprep.subr.bf16.mxu0 0
    %990 = vmatpush1.bf16.msra.mxu0 %v899
    %991 = vmatprep.subr.bf16.mxu0 0
    %992 = vmatpush1.bf16.msra.mxu0 %v900
    %993 = vmatprep.subr.bf16.mxu0 0
    %994 = vmatpush1.bf16.msra.mxu0 %v901
    %995 = vmatprep.subr.bf16.mxu0 0
    %996 = vmatpush1.bf16.msra.mxu0 %v902
    %997 = vmatprep.subr.bf16.mxu0 0
    %998 = vmatpush1.bf16.msra.mxu0 %v903
    %999 = vmatprep.subr.bf16.mxu0 0
    %1000 = vmatpush1.bf16.msra.mxu0 %v904
    %1001 = vmatprep.subr.bf16.mxu0 0
    %1002 = vmatpush1.bf16.msra.mxu0 %v905
    %1003 = vmatprep.subr.bf16.mxu0 0
    %1004 = vmatpush1.bf16.msra.mxu0 %v906
    %1005 = vmatprep.subr.bf16.mxu0 0
    %1006 = vmatpush1.bf16.msra.mxu0 %v907
    %1007 = vmatprep.subr.bf16.mxu0 0
    %1008 = vmatpush1.bf16.msra.mxu0 %v908
    %1009 = vmatprep.subr.bf16.mxu0 0
    %1010 = vmatpush1.bf16.msra.mxu0 %v909
    %1011 = vmatprep.subr.bf16.mxu0 0
    %1012 = vmatpush1.bf16.msra.mxu0 %v910
    %1013 = vmatprep.subr.bf16.mxu0 0
    %1014 = vmatpush1.bf16.msra.mxu0 %v911
    %1015 = vmatprep.subr.bf16.mxu0 0
    %1016 = vmatpush1.bf16.msra.mxu0 %v912
    %1017 = vmatprep.subr.bf16.mxu0 0
    %1018 = vmatpush1.bf16.msra.mxu0 %v913
    %1019 = vmatprep.mubr.bf16.mxu0 %v689
    %1020 = vmatmul.mubr.bf16.gmra.mrb[0].mxu0 %v688
    %v1021 = vpop.f32.mrb[0].mxu0
    %v1022 = vadd.f32 %v981, %v1021
    %v1023 = vpop.f32.mrb[0].mxu0
    %v1024 = vpop.f32.mrb[0].mxu0
    %v1025 = vadd.f32 %v984, %v1024
    %v1026 = vpop.f32.mrb[0].mxu0
    %1027 = vdwg.mxu0
    %v1028 = vadd.f32 %v122, %v1022
    %v1029 = vadd.f32 %v123, %v1025
    %v1030 = vld [vmem:[%s8] sm:$0x1]
    %v1032 = vlaneseq
    %v1033 = vshrl.u32 %v1032, 7
    %v1034 = vsub.s32 0, %v1033
    %v1035 = vrot.slane %v1030, %v1034
    %v1037 = vadd.f32 %v1028, %v1035
    %v1038 = vadd.f32 %v1029, %v1035
    %1039 = vst [vmem:[#allocation8] sm:$0xff] %v1037
    %1040 = vst [vmem:[#allocation8 + $0x8] sm:$0xff] %v1038
    // Predicated region
    $region50: #{tpu_custom_call.1} parent=1 // pred_check
      _
    $region51: #{tpu_custom_call.1} parent=1 // pred_check_branch
      %1042 = sbr.rel (0) target = $region53
    $region52: #{tpu_custom_call.1} parent=1 // pred_region
      %s1044 = ssub.s32 256, 256
      %1045 = vsyncadd [#allocation4], %s1044
      %s1046 = sshll.u32 [#allocation8], 4
      %s1047 = int_to_ptr.vmem [resolvable:$true] %s1046
      %1052 = dma.vmem_to_hbm [thread:$0]  %s1047, 256, %s9, [#allocation4], 128, 128, 8
    $region53: #{tpu_custom_call.1} parent=1 // pred_fallthru
      _
    // Predicated region
    $region54: #{tpu_custom_call.1} parent=1 // pred_check
      _
    $region55: #{tpu_custom_call.1} parent=1 // pred_check_branch
      %1054 = sbr.rel (0) target = $region57
    $region56: #{tpu_custom_call.1} parent=1 // pred_region
      %1055 = dma.done [#allocation4], 256
    $region57: #{tpu_custom_call.1} parent=1 // pred_fallthru
      _
    %1056 = vsyncpa [#allocation3], 1
    %1057 = vsyncpa [#allocation6], 1
    %1058 = vsyncpa [#allocation4], 1

</llo_original>
